<compile_context>
chip_gen: v5e
topology: v5e:2x2
jax: 0.10.0
libtpu: 0.0.40
codegen_flags: <defaults>
</compile_context>

<pallas_src>
import functools

import jax
import jax.numpy as jnp
from jax import lax
from jax.experimental import pallas as pl
from jax.experimental.pallas import tpu as pltpu


KERNEL_SIZE = 7
PAD = 3          # "same" padding for kernel_size=7, stride=1, dilation=1
C_CONV = 64      # conv channel count from the torch module


# --------------------------------------------------------------------------
# small static helpers
# --------------------------------------------------------------------------
def _time_chunk(T, B, target_rows=1024):
    """Largest divisor tc of T with (tc*B) % 8 == 0 and tc*B <= target_rows.
    Falls back to a single chunk (block == full array is always legal)."""
    limit = max(1, target_rows // max(B, 1))
    for tc in range(min(T, limit), 0, -1):
        if T % tc == 0 and (tc * B) % 8 == 0:
            return tc
    return T


def _unroll_for(T):
    for u in (8, 4, 2):
        if T % u == 0:
            return u
    return 1


def _vmem_limit(*nbytes):
    est = 2 * int(sum(nbytes)) + (4 << 20)
    return int(min(max(est, 32 << 20), 100 << 20))


# --------------------------------------------------------------------------
# Kernel 1: conv1 (one im2col matmul) -> conv2 (7 shifted-slice matmuls)
#           -> GRU layer-0 input projection.  Grid over time chunks.
# --------------------------------------------------------------------------
def _conv_proj_kernel(cols_ref, w1_ref, b1_ref, w2_ref, b2_ref, wih_ref, bih_ref,
                      o_ref, h1_scr, *, batch, pad):
    # cols_ref: ((tc+2*pad)*B, K*Cin) bf16  conv1 im2col over the extended window
    # w1_ref:   (K*Cin, C1) bf16    b1_ref: (1, C1) f32
    # w2_ref:   (K, C1, C1) bf16    b2_ref: (1, C1) f32   (w2[k] = W2_k^T)
    # wih_ref:  (C1, 6H)    bf16    bih_ref: (1, 6H) f32  (fwd|bwd W_ih^T, b_ih)
    # o_ref:    (tc*B, 6H)  f32  flat time-major gx0 rows for this chunk
    # h1_scr:   ((tc+2*pad)*B, C1) bf16
    B = batch
    K = w2_ref.shape[0]
    C1 = w2_ref.shape[2]
    rows_out = o_ref.shape[0]

    # conv1 as ONE matmul over the chunk's extended (+/- pad) time window.
    h1 = (jnp.dot(cols_ref[...], w1_ref[...],
                  preferred_element_type=jnp.float32) + b1_ref[...])
    h1_scr[...] = h1.astype(jnp.bfloat16)

    # conv2 zero-pads the *intermediate*: zero only the border rows, and only
    # in the chunks that actually touch the sequence boundary.
    zeros_pad = jnp.zeros((pad * B, C1), jnp.bfloat16)

    @pl.when(pl.program_id(0) == 0)
    def _():
        h1_scr[0:pad * B, :] = zeros_pad

    @pl.when(pl.program_id(0) == pl.num_programs(0) - 1)
    def _():
        h1_scr[rows_out + pad * B:rows_out + 2 * pad * B, :] = zeros_pad

    # conv2 as K shifted-slice matmuls accumulated in f32 (no im2col copies).
    acc = jnp.zeros((rows_out, C1), jnp.float32)
    for k in range(K):
        acc = acc + jnp.dot(h1_scr[k * B:k * B + rows_out, :], w2_ref[k],
                            preferred_element_type=jnp.float32)
    h2 = acc + b2_ref[...]

    # GRU layer-0 input projection (hoisted out of the recurrence), both dirs.
    o_ref[...] = (jnp.dot(h2.astype(jnp.bfloat16), wih_ref[...],
                          preferred_element_type=jnp.float32) + bih_ref[...])


# --------------------------------------------------------------------------
# Kernels 2/3: fused bidirectional GRU layer + epilogue projection
#   (epilogue = next layer's input projection, or the padded final Linear)
# PyTorch gate ordering (r, z, n), h0 = 0.
# --------------------------------------------------------------------------
def _gru_bidir_kernel(gx_ref, whh_ref, bhh_ref, wnext_ref, bnext_ref,
                      y_ref, seq_scr, *, seq_len, batch, unroll):
    # gx_ref:    (T*B, 6H) f32  precomputed x@W_ih + b_ih; cols [0:3H] fwd, [3H:6H] bwd
    # whh_ref:   (H, 6H)  bf16  [W_hh_fwd^T | W_hh_bwd^T]
    # bhh_ref:   (1, 6H)  f32
    # wnext_ref: (2H, N)  bf16  next-layer input proj (or zero-padded Linear)
    # bnext_ref: (1, N)   f32
    # y_ref:     (T*B, N) f32
    # seq_scr:   (T*B, 2H) bf16  bidirectional output, VMEM only (matmul input)
    T, B = seq_len, batch
    H = whh_ref.shape[0]
    whh = whh_ref[...]
    bhh = bhh_ref[...]
    rows_aligned = (B % 8 == 0)

    def gates(gx, gh, h_prev):
        r = jax.nn.sigmoid(gx[:, 0:H] + gh[:, 0:H])
        z = jax.nn.sigmoid(gx[:, H:2 * H] + gh[:, H:2 * H])
        n = jnp.tanh(gx[:, 2 * H:3 * H] + r * gh[:, 2 * H:3 * H])
        return (1.0 - z) * n + z * h_prev

    def step(t, h_cat):                         # h_cat: (2B, H) f32, rows [fwd; bwd]
        rt = T - 1 - t
        row_f = t * B
        row_b = rt * B
        if rows_aligned:
            row_f = pl.multiple_of(row_f, 8)
            row_b = pl.multiple_of(row_b, 8)
        # ONE recurrent matmul per step for both directions (M=2B, N=6H).
        gh = (jnp.dot(h_cat.astype(jnp.bfloat16), whh,
                      preferred_element_type=jnp.float32) + bhh)           # (2B, 6H)
        gx_f = gx_ref[pl.ds(row_f, B), 0:3 * H]
        gx_b = gx_ref[pl.ds(row_b, B), 3 * H:6 * H]
        h_f = gates(gx_f, gh[0:B, 0:3 * H], h_cat[0:B])
        h_b = gates(gx_b, gh[B:2 * B, 3 * H:6 * H], h_cat[B:2 * B])
        seq_scr[pl.ds(row_f, B), 0:H] = h_f.astype(jnp.bfloat16)
        seq_scr[pl.ds(row_b, B), H:2 * H] = h_b.astype(jnp.bfloat16)
        return jnp.concatenate([h_f, h_b], axis=0)

    lax.fori_loop(0, T, step, jnp.zeros((2 * B, H), jnp.float32), unroll=unroll)

    # Epilogue: project the whole resident (T*B, 2H) sequence in one MXU matmul.
    y_ref[...] = (jnp.dot(seq_scr[...], wnext_ref[...],
                          preferred_element_type=jnp.float32) + bnext_ref[...])


def _gru_bidir_layer(gx_flat, whh, bhh, wnext, bnext, *, seq_len, batch, n_out,
                     unroll):
    T, B = seq_len, batch
    H = whh.shape[0]
    vmem = _vmem_limit(T * B * 6 * H * 4,          # gx
                       T * B * n_out * 4,          # y
                       T * B * 2 * H * 2,          # seq scratch (bf16)
                       (H * 6 * H + 2 * H * n_out) * 2)
    kern = functools.partial(_gru_bidir_kernel, seq_len=T, batch=B, unroll=unroll)
    # TODO(synk): v7x — add a batch-chunk parallel grid (one chunk per TensorCore,
    #   needs B % 16 == 0 and a chunk-major flat row layout); single program here.
    # TODO(synk): long T — stream gx/seq through VMEM with a manually
    #   double-buffered time-chunk pipeline instead of keeping them resident.
    return pl.pallas_call(
        kern,
        out_shape=jax.ShapeDtypeStruct((T * B, n_out), jnp.float32),
        scratch_shapes=[pltpu.VMEM((T * B, 2 * H), jnp.bfloat16)],
        compiler_params=pltpu.CompilerParams(vmem_limit_bytes=vmem),
    )(gx_flat, whh, bhh, wnext, bnext)


# --------------------------------------------------------------------------
# Parameter init (torch layout, used by the reference) + one-time packing
# --------------------------------------------------------------------------
def init_params(key, input_size, output_size, hidden_size=128):
    H = hidden_size

    def uni(k, shape, fan):
        bound = 1.0 / jnp.sqrt(jnp.float32(fan))
        return jax.random.uniform(k, shape, jnp.float32, -bound, bound)

    keys = iter(jax.random.split(key, 64))
    params = {
        "hidden_size": H,
        "cnn1_w": uni(next(keys), (C_CONV, input_size, KERNEL_SIZE), input_size * KERNEL_SIZE),
        "cnn1_b": uni(next(keys), (C_CONV,), input_size * KERNEL_SIZE),
        "cnn2_w": uni(next(keys), (C_CONV, C_CONV, KERNEL_SIZE), C_CONV * KERNEL_SIZE),
        "cnn2_b": uni(next(keys), (C_CONV,), C_CONV * KERNEL_SIZE),
        "dnn1_w": uni(next(keys), (output_size, 2 * H), 2 * H),
        "dnn1_b": uni(next(keys), (output_size,), 2 * H),
    }
    for layer in range(2):
        d_in = C_CONV if layer == 0 else 2 * H
        for tag in ("f", "b"):
            params[f"gru_l{layer}_{tag}"] = (
                uni(next(keys), (3 * H, d_in), H),   # w_ih
                uni(next(keys), (3 * H, H), H),      # w_hh
                uni(next(keys), (3 * H,), H),        # b_ih
                uni(next(keys), (3 * H,), H),        # b_hh
            )
    return params


def pack_params(p):
    """Pre-transpose / concatenate / pad / bf16-cast weights once (not per forward)."""
    H = p["hidden_size"]
    f32, bf16 = jnp.float32, jnp.bfloat16

    # conv1 im2col layout: (Cout, Cin, K) -> (K*Cin, Cout)
    w1 = p["cnn1_w"]
    c1_w = jnp.transpose(w1, (2, 1, 0)).reshape(w1.shape[2] * w1.shape[1],
                                                w1.shape[0]).astype(bf16)
    # conv2 per-tap stack: c2_w[k] = W2_k^T  (shape (K, C1, C1))
    c2_w = jnp.transpose(p["cnn2_w"], (2, 1, 0)).astype(bf16)

    def gru_cat(layer):
        wih_f, whh_f, bih_f, bhh_f = p[f"gru_l{layer}_f"]
        wih_b, whh_b, bih_b, bhh_b = p[f"gru_l{layer}_b"]
        wih = jnp.concatenate([wih_f.T, wih_b.T], axis=1).astype(bf16)   # (Din, 6H)
        whh = jnp.concatenate([whh_f.T, whh_b.T], axis=1).astype(bf16)   # (H, 6H)
        bih = jnp.concatenate([bih_f, bih_b]).reshape(1, 6 * H).astype(f32)
        bhh = jnp.concatenate([bhh_f, bhh_b]).reshape(1, 6 * H).astype(f32)
        return wih, bih, whh, bhh

    wih0, bih0, whh0, bhh0 = gru_cat(0)
    wih1, bih1, whh1, bhh1 = gru_cat(1)

    Dout = p["dnn1_w"].shape[0]
    P = max(128, pl.cdiv(Dout, 128) * 128)    # lane-dense padded output width
    wlin = jnp.zeros((2 * H, P), f32).at[:, :Dout].set(p["dnn1_w"].T).astype(bf16)
    blin = jnp.zeros((1, P), f32).at[0, :Dout].set(p["dnn1_b"])

    return {
        "hidden_size": H, "out_size": Dout, "out_pad": P,
        "c1_w": c1_w, "c1_b": p["cnn1_b"].reshape(1, -1).astype(f32),
        "c2_w": c2_w, "c2_b": p["cnn2_b"].reshape(1, -1).astype(f32),
        "wih0": wih0, "bih0": bih0, "whh0": whh0, "bhh0": bhh0,
        "wih1": wih1, "bih1": bih1, "whh1": whh1, "bhh1": bhh1,
        "wlin": wlin, "blin": blin,
    }


# --------------------------------------------------------------------------
# Full forward pass (3 pallas_calls)
# --------------------------------------------------------------------------
def cnn_model_forward(kp, x):
    # x: (B, T, input_size)  -- torch "batch_first" layout
    B, T, Cin = x.shape
    H = kp["hidden_size"]
    P = kp["out_pad"]
    Dout = kp["out_size"]
    K = KERNEL_SIZE
    C1 = C_CONV

    tc = _time_chunk(T, B)
    n_ch = T // tc
    u = _unroll_for(T)

    # ---- tiny wrapper-side layout prep (x is the smallest tensor in the net) --
    # time-major, zero-padded by 2*PAD: conv1 is evaluated on the extended range
    # needed by conv2's "same" padding of the intermediate.
    x_tm = jnp.transpose(x, (1, 0, 2))                                   # (T,B,Cin)
    x_p = jnp.pad(x_tm, ((2 * PAD, 2 * PAD), (0, 0), (0, 0)))            # (T+12,B,Cin)
    cols1 = jnp.concatenate([x_p[k:k + T + 2 * PAD] for k in range(K)], axis=-1)
    # overlapping per-chunk windows, flattened to rows = t*B + b, bf16 for the MXU
    cols1w = jnp.stack([cols1[c * tc:c * tc + tc + 2 * PAD] for c in range(n_ch)])
    r_in = (tc + 2 * PAD) * B
    cols1w = cols1w.reshape(n_ch, r_in, K * Cin).astype(jnp.bfloat16)

    conv_vmem = _vmem_limit(r_in * K * Cin * 2,
                            tc * B * 6 * H * 4,
                            r_in * C1 * 2,
                            (K * Cin * C1 + K * C1 * C1 + C1 * 6 * H) * 2)

    # conv1 -> conv2 -> GRU layer-0 input projection; flat time-major output,
    # so no HBM transpose between this kernel and the GRU kernels.
    gx0 = pl.pallas_call(
        functools.partial(_conv_proj_kernel, batch=B, pad=PAD),
        out_shape=jax.ShapeDtypeStruct((T * B, 6 * H), jnp.float32),
        grid=(n_ch,),
        in_specs=[
            pl.BlockSpec((None, r_in, K * Cin), lambda c: (c, 0, 0)),
            pl.BlockSpec((K * Cin, C1), lambda c: (0, 0)),
            pl.BlockSpec((1, C1), lambda c: (0, 0)),
            pl.BlockSpec((K, C1, C1), lambda c: (0, 0, 0)),
            pl.BlockSpec((1, C1), lambda c: (0, 0)),
            pl.BlockSpec((C1, 6 * H), lambda c: (0, 0)),
            pl.BlockSpec((1, 6 * H), lambda c: (0, 0)),
        ],
        out_specs=pl.BlockSpec((tc * B, 6 * H), lambda c: (c, 0)),
        scratch_shapes=[pltpu.VMEM((r_in, C1), jnp.bfloat16)],
        compiler_params=pltpu.CompilerParams(
            dimension_semantics=("parallel",), vmem_limit_bytes=conv_vmem),
    )(cols1w, kp["c1_w"], kp["c1_b"], kp["c2_w"], kp["c2_b"],
      kp["wih0"], kp["bih0"])

    # GRU layer 0 (fwd+bwd fused) -> epilogue computes layer-1 input gates.
    # TODO(synk): nn.GRU training-mode dropout (p=0.2) between layers is an
    # eval-mode no-op and is not implemented here.
    gx1 = _gru_bidir_layer(gx0, kp["whh0"], kp["bhh0"], kp["wih1"], kp["bih1"],
                           seq_len=T, batch=B, n_out=6 * H, unroll=u)

    # GRU layer 1 (fwd+bwd fused) -> epilogue is the final Linear (lane-dense).
    y = _gru_bidir_layer(gx1, kp["whh1"], kp["bhh1"], kp["wlin"], kp["blin"],
                         seq_len=T, batch=B, n_out=P, unroll=u)

    # single small transpose (P = 128 lanes) + slice back to torch layout
    out = jnp.transpose(y.reshape(T, B, P), (1, 0, 2))[:, :, :Dout]
    return out


# --------------------------------------------------------------------------
# Pure-JAX reference (same bf16-matmul / f32-accumulate precision policy)
# --------------------------------------------------------------------------
def _bdot(a, b):
    return jnp.dot(a.astype(jnp.bfloat16), b.astype(jnp.bfloat16),
                   preferred_element_type=jnp.float32)


def _ref_conv1d(x, w, b, padding=PAD):
    B, T, _ = x.shape
    K, Cout = w.shape[2], w.shape[0]
    xp = jnp.pad(x, ((0, 0), (padding, padding), (0, 0)))
    out = jnp.zeros((B, T, Cout), jnp.float32)
    for k in range(K):
        out = out + _bdot(xp[:, k:k + T, :].reshape(B * T, -1),
                          w[:, :, k].T).reshape(B, T, Cout)
    return out + b


def _ref_gru_dir(x_tbd, w_ih, w_hh, b_ih, b_hh, H):
    B = x_tbd.shape[1]

    def step(h, x_t):
        gx = _bdot(x_t, w_ih.T) + b_ih
        gh = _bdot(h, w_hh.T) + b_hh
        r = jax.nn.sigmoid(gx[:, :H] + gh[:, :H])
        z = jax.nn.sigmoid(gx[:, H:2 * H] + gh[:, H:2 * H])
        n = jnp.tanh(gx[:, 2 * H:] + r * gh[:, 2 * H:])
        h_new = (1.0 - z) * n + z * h
        return h_new, h_new

    h0 = jnp.zeros((B, H), jnp.float32)
    _, ys = lax.scan(step, h0, x_tbd)
    return ys


def ref_forward(params, x):
    B, T, _ = x.shape
    H = params["hidden_size"]
    h = _ref_conv1d(x, params["cnn1_w"], params["cnn1_b"])
    h = _ref_conv1d(h, params["cnn2_w"], params["cnn2_b"])
    seq = jnp.transpose(h, (1, 0, 2))
    for layer in range(2):
        fwd = _ref_gru_dir(seq, *params[f"gru_l{layer}_f"], H)
        bwd = _ref_gru_dir(seq[::-1], *params[f"gru_l{layer}_b"], H)[::-1]
        seq = jnp.concatenate([fwd, bwd], axis=-1)
    rnn_out = jnp.transpose(seq, (1, 0, 2)).reshape(B * T, 2 * H)
    out = _bdot(rnn_out, params["dnn1_w"].T) + params["dnn1_b"]
    return out.reshape(B, T, -1)


# --------------------------------------------------------------------------
if __name__ == "__main__":
    B, T = 2, 8
    input_size, output_size, hidden_size = 4, 5, 128

    key = jax.random.PRNGKey(0)
    k_params, k_x = jax.random.split(key)
    params = init_params(k_params, input_size, output_size, hidden_size)
    packed = pack_params(params)
    x = jax.random.normal(k_x, (B, T, input_size), jnp.float32)

    out = jax.block_until_ready(cnn_model_forward(packed, x))
    expected = jax.block_until_ready(ref_forward(params, x))

    assert out.shape == (B, T, output_size), out.shape
    max_err = float(jnp.max(jnp.abs(out - expected)))
    assert max_err < 2e-2, max_err
    print("KERNEL_OK")
</pallas_src>

<mosaic_0001>
module attributes {stable_mosaic.version = 11 : i64} {
  func.func @_conv_proj_kernel(%arg0: i32, %arg1: memref<1x28x28xbf16, #tpu.memory_space<vmem>>, %arg2: memref<28x64xbf16, #tpu.memory_space<vmem>>, %arg3: memref<1x64xf32, #tpu.memory_space<vmem>>, %arg4: memref<7x64x64xbf16, #tpu.memory_space<vmem>>, %arg5: memref<1x64xf32, #tpu.memory_space<vmem>>, %arg6: memref<64x768xbf16, #tpu.memory_space<vmem>>, %arg7: memref<1x768xf32, #tpu.memory_space<vmem>>, %arg8: memref<16x768xf32, #tpu.memory_space<vmem>>, %arg9: memref<28x64xbf16, #tpu.memory_space<vmem>>) attributes {dimension_semantics = [#tpu.dimension_semantics<parallel>], iteration_bounds = array<i64: 1>, scalar_prefetch = 0 : i64, scratch_operands = 1 : i64, tpu.core_type = #tpu.core_type<tc>, window_params = [{transform_indices = @transform_0, window_bounds = array<i64: 1, 28, 28>}, {pipeline_mode = #tpu.pipeline_mode<synchronous>, transform_indices = @transform_1, window_bounds = array<i64: 28, 64>}, {pipeline_mode = #tpu.pipeline_mode<synchronous>, transform_indices = @transform_2, window_bounds = array<i64: 1, 64>}, {pipeline_mode = #tpu.pipeline_mode<synchronous>, transform_indices = @transform_3, window_bounds = array<i64: 7, 64, 64>}, {pipeline_mode = #tpu.pipeline_mode<synchronous>, transform_indices = @transform_4, window_bounds = array<i64: 1, 64>}, {pipeline_mode = #tpu.pipeline_mode<synchronous>, transform_indices = @transform_5, window_bounds = array<i64: 64, 768>}, {pipeline_mode = #tpu.pipeline_mode<synchronous>, transform_indices = @transform_6, window_bounds = array<i64: 1, 768>}, {transform_indices = @transform_7, window_bounds = array<i64: 16, 768>}]} {
    %c0 = arith.constant 0 : index
    %c0_0 = arith.constant 0 : index
    %c0_1 = arith.constant 0 : index
    %0 = vector.load %arg1[%c0, %c0_0, %c0_1] : memref<1x28x28xbf16, #tpu.memory_space<vmem>>, vector<1x28x28xbf16>
    %1 = vector.shape_cast %0 : vector<1x28x28xbf16> to vector<28x28xbf16>
    %c0_2 = arith.constant 0 : index
    %c0_3 = arith.constant 0 : index
    %2 = vector.load %arg2[%c0_2, %c0_3] : memref<28x64xbf16, #tpu.memory_space<vmem>>, vector<28x64xbf16>
    %cst = arith.constant dense<0.000000e+00> : vector<28x64xf32>
    %3 = tpu.matmul %1, %2, %cst {dimension_numbers = #tpu.dot_dimension_numbers<[1], [0], [0], [1], [0, 0, 1, 1], [], []>} : vector<28x28xbf16>, vector<28x64xbf16>, vector<28x64xf32> -> vector<28x64xf32>
    %c0_4 = arith.constant 0 : index
    %c0_5 = arith.constant 0 : index
    %4 = vector.load %arg3[%c0_4, %c0_5] : memref<1x64xf32, #tpu.memory_space<vmem>>, vector<1x64xf32>
    %5 = vector.broadcast %4 : vector<1x64xf32> to vector<28x64xf32>
    %6 = arith.addf %3, %5 : vector<28x64xf32>
    %7 = arith.truncf %6 : vector<28x64xf32> to vector<28x64xbf16>
    %c0_6 = arith.constant 0 : index
    %c0_7 = arith.constant 0 : index
    %8 = vector.load %arg9[%c0_6, %c0_7] : memref<28x64xbf16, #tpu.memory_space<vmem>>, vector<28x64xbf16>
    tpu.vector_store %arg9[%c0_6, %c0_7], %7 {strides = array<i32>} : memref<28x64xbf16, #tpu.memory_space<vmem>>, vector<28x64xbf16>,
    %cst_8 = arith.constant 0.000000e+00 : bf16
    %9 = vector.broadcast %cst_8 : bf16 to vector<6x64xbf16>
    %c0_i32 = arith.constant 0 : i32
    %10 = arith.cmpi eq, %arg0, %c0_i32 : i32
    %11 = arith.extui %10 : i1 to i32
    %c0_i32_9 = arith.constant 0 : i32
    %12 = arith.cmpi ne, %11, %c0_i32_9 : i32
    scf.if %12 {
      %c0_55 = arith.constant 0 : index
      %c0_56 = arith.constant 0 : index
      %62 = vector.load %arg9[%c0_55, %c0_56] : memref<28x64xbf16, #tpu.memory_space<vmem>>, vector<6x64xbf16>
      tpu.vector_store %arg9[%c0_55, %c0_56], %9 {strides = array<i32>} : memref<28x64xbf16, #tpu.memory_space<vmem>>, vector<6x64xbf16>,
    } else {
    }
    %c0_i32_10 = arith.constant 0 : i32
    %13 = arith.cmpi eq, %arg0, %c0_i32_10 : i32
    %14 = arith.extui %13 : i1 to i32
    %c0_i32_11 = arith.constant 0 : i32
    %15 = arith.cmpi ne, %14, %c0_i32_11 : i32
    scf.if %15 {
      %c22 = arith.constant 22 : index
      %c0_55 = arith.constant 0 : index
      %62 = vector.load %arg9[%c22, %c0_55] : memref<28x64xbf16, #tpu.memory_space<vmem>>, vector<6x64xbf16>
      tpu.vector_store %arg9[%c22, %c0_55], %9 {strides = array<i32>} : memref<28x64xbf16, #tpu.memory_space<vmem>>, vector<6x64xbf16>,
    } else {
    }
    %cst_12 = arith.constant 0.000000e+00 : f32
    %16 = vector.broadcast %cst_12 : f32 to vector<16x64xf32>
    %c0_13 = arith.constant 0 : index
    %c0_14 = arith.constant 0 : index
    %17 = vector.load %arg9[%c0_13, %c0_14] : memref<28x64xbf16, #tpu.memory_space<vmem>>, vector<16x64xbf16>
    %c0_15 = arith.constant 0 : index
    %c0_16 = arith.constant 0 : index
    %c0_17 = arith.constant 0 : index
    %18 = vector.load %arg4[%c0_15, %c0_16, %c0_17] : memref<7x64x64xbf16, #tpu.memory_space<vmem>>, vector<1x64x64xbf16>
    %19 = vector.shape_cast %18 : vector<1x64x64xbf16> to vector<64x64xbf16>
    %cst_18 = arith.constant dense<0.000000e+00> : vector<16x64xf32>
    %20 = tpu.matmul %17, %19, %cst_18 {dimension_numbers = #tpu.dot_dimension_numbers<[1], [0], [0], [1], [0, 0, 1, 1], [], []>} : vector<16x64xbf16>, vector<64x64xbf16>, vector<16x64xf32> -> vector<16x64xf32>
    %21 = arith.addf %16, %20 : vector<16x64xf32>
    %c2 = arith.constant 2 : index
    %c0_19 = arith.constant 0 : index
    %22 = vector.load %arg9[%c2, %c0_19] : memref<28x64xbf16, #tpu.memory_space<vmem>>, vector<16x64xbf16>
    %c1 = arith.constant 1 : index
    %c0_20 = arith.constant 0 : index
    %c0_21 = arith.constant 0 : index
    %23 = vector.load %arg4[%c1, %c0_20, %c0_21] : memref<7x64x64xbf16, #tpu.memory_space<vmem>>, vector<1x64x64xbf16>
    %24 = vector.shape_cast %23 : vector<1x64x64xbf16> to vector<64x64xbf16>
    %cst_22 = arith.constant dense<0.000000e+00> : vector<16x64xf32>
    %25 = tpu.matmul %22, %24, %cst_22 {dimension_numbers = #tpu.dot_dimension_numbers<[1], [0], [0], [1], [0, 0, 1, 1], [], []>} : vector<16x64xbf16>, vector<64x64xbf16>, vector<16x64xf32> -> vector<16x64xf32>
    %26 = arith.addf %21, %25 : vector<16x64xf32>
    %c4 = arith.constant 4 : index
    %c0_23 = arith.constant 0 : index
    %27 = vector.load %arg9[%c4, %c0_23] : memref<28x64xbf16, #tpu.memory_space<vmem>>, vector<16x64xbf16>
    %c2_24 = arith.constant 2 : index
    %c0_25 = arith.constant 0 : index
    %c0_26 = arith.constant 0 : index
    %28 = vector.load %arg4[%c2_24, %c0_25, %c0_26] : memref<7x64x64xbf16, #tpu.memory_space<vmem>>, vector<1x64x64xbf16>
    %29 = vector.shape_cast %28 : vector<1x64x64xbf16> to vector<64x64xbf16>
    %cst_27 = arith.constant dense<0.000000e+00> : vector<16x64xf32>
    %30 = tpu.matmul %27, %29, %cst_27 {dimension_numbers = #tpu.dot_dimension_numbers<[1], [0], [0], [1], [0, 0, 1, 1], [], []>} : vector<16x64xbf16>, vector<64x64xbf16>, vector<16x64xf32> -> vector<16x64xf32>
    %31 = arith.addf %26, %30 : vector<16x64xf32>
    %c6 = arith.constant 6 : index
    %c0_28 = arith.constant 0 : index
    %32 = vector.load %arg9[%c6, %c0_28] : memref<28x64xbf16, #tpu.memory_space<vmem>>, vector<16x64xbf16>
    %c3 = arith.constant 3 : index
    %c0_29 = arith.constant 0 : index
    %c0_30 = arith.constant 0 : index
    %33 = vector.load %arg4[%c3, %c0_29, %c0_30] : memref<7x64x64xbf16, #tpu.memory_space<vmem>>, vector<1x64x64xbf16>
    %34 = vector.shape_cast %33 : vector<1x64x64xbf16> to vector<64x64xbf16>
    %cst_31 = arith.constant dense<0.000000e+00> : vector<16x64xf32>
    %35 = tpu.matmul %32, %34, %cst_31 {dimension_numbers = #tpu.dot_dimension_numbers<[1], [0], [0], [1], [0, 0, 1, 1], [], []>} : vector<16x64xbf16>, vector<64x64xbf16>, vector<16x64xf32> -> vector<16x64xf32>
    %36 = arith.addf %31, %35 : vector<16x64xf32>
    %c8 = arith.constant 8 : index
    %c0_32 = arith.constant 0 : index
    %37 = vector.load %arg9[%c8, %c0_32] : memref<28x64xbf16, #tpu.memory_space<vmem>>, vector<16x64xbf16>
    %c4_33 = arith.constant 4 : index
    %c0_34 = arith.constant 0 : index
    %c0_35 = arith.constant 0 : index
    %38 = vector.load %arg4[%c4_33, %c0_34, %c0_35] : memref<7x64x64xbf16, #tpu.memory_space<vmem>>, vector<1x64x64xbf16>
    %39 = vector.shape_cast %38 : vector<1x64x64xbf16> to vector<64x64xbf16>
    %cst_36 = arith.constant dense<0.000000e+00> : vector<16x64xf32>
    %40 = tpu.matmul %37, %39, %cst_36 {dimension_numbers = #tpu.dot_dimension_numbers<[1], [0], [0], [1], [0, 0, 1, 1], [], []>} : vector<16x64xbf16>, vector<64x64xbf16>, vector<16x64xf32> -> vector<16x64xf32>
    %41 = arith.addf %36, %40 : vector<16x64xf32>
    %c10 = arith.constant 10 : index
    %c0_37 = arith.constant 0 : index
    %42 = vector.load %arg9[%c10, %c0_37] : memref<28x64xbf16, #tpu.memory_space<vmem>>, vector<16x64xbf16>
    %c5 = arith.constant 5 : index
    %c0_38 = arith.constant 0 : index
    %c0_39 = arith.constant 0 : index
    %43 = vector.load %arg4[%c5, %c0_38, %c0_39] : memref<7x64x64xbf16, #tpu.memory_space<vmem>>, vector<1x64x64xbf16>
    %44 = vector.shape_cast %43 : vector<1x64x64xbf16> to vector<64x64xbf16>
    %cst_40 = arith.constant dense<0.000000e+00> : vector<16x64xf32>
    %45 = tpu.matmul %42, %44, %cst_40 {dimension_numbers = #tpu.dot_dimension_numbers<[1], [0], [0], [1], [0, 0, 1, 1], [], []>} : vector<16x64xbf16>, vector<64x64xbf16>, vector<16x64xf32> -> vector<16x64xf32>
    %46 = arith.addf %41, %45 : vector<16x64xf32>
    %c12 = arith.constant 12 : index
    %c0_41 = arith.constant 0 : index
    %47 = vector.load %arg9[%c12, %c0_41] : memref<28x64xbf16, #tpu.memory_space<vmem>>, vector<16x64xbf16>
    %c6_42 = arith.constant 6 : index
    %c0_43 = arith.constant 0 : index
    %c0_44 = arith.constant 0 : index
    %48 = vector.load %arg4[%c6_42, %c0_43, %c0_44] : memref<7x64x64xbf16, #tpu.memory_space<vmem>>, vector<1x64x64xbf16>
    %49 = vector.shape_cast %48 : vector<1x64x64xbf16> to vector<64x64xbf16>
    %cst_45 = arith.constant dense<0.000000e+00> : vector<16x64xf32>
    %50 = tpu.matmul %47, %49, %cst_45 {dimension_numbers = #tpu.dot_dimension_numbers<[1], [0], [0], [1], [0, 0, 1, 1], [], []>} : vector<16x64xbf16>, vector<64x64xbf16>, vector<16x64xf32> -> vector<16x64xf32>
    %51 = arith.addf %46, %50 : vector<16x64xf32>
    %c0_46 = arith.constant 0 : index
    %c0_47 = arith.constant 0 : index
    %52 = vector.load %arg5[%c0_46, %c0_47] : memref<1x64xf32, #tpu.memory_space<vmem>>, vector<1x64xf32>
    %53 = vector.broadcast %52 : vector<1x64xf32> to vector<16x64xf32>
    %54 = arith.addf %51, %53 : vector<16x64xf32>
    %55 = arith.truncf %54 : vector<16x64xf32> to vector<16x64xbf16>
    %c0_48 = arith.constant 0 : index
    %c0_49 = arith.constant 0 : index
    %56 = vector.load %arg6[%c0_48, %c0_49] : memref<64x768xbf16, #tpu.memory_space<vmem>>, vector<64x768xbf16>
    %cst_50 = arith.constant dense<0.000000e+00> : vector<16x768xf32>
    %57 = tpu.matmul %55, %56, %cst_50 {dimension_numbers = #tpu.dot_dimension_numbers<[1], [0], [0], [1], [0, 0, 1, 1], [], []>} : vector<16x64xbf16>, vector<64x768xbf16>, vector<16x768xf32> -> vector<16x768xf32>
    %c0_51 = arith.constant 0 : index
    %c0_52 = arith.constant 0 : index
    %58 = vector.load %arg7[%c0_51, %c0_52] : memref<1x768xf32, #tpu.memory_space<vmem>>, vector<1x768xf32>
    %59 = vector.broadcast %58 : vector<1x768xf32> to vector<16x768xf32>
    %60 = arith.addf %57, %59 : vector<16x768xf32>
    %c0_53 = arith.constant 0 : index
    %c0_54 = arith.constant 0 : index
    %61 = vector.load %arg8[%c0_53, %c0_54] : memref<16x768xf32, #tpu.memory_space<vmem>>, vector<16x768xf32>
    tpu.vector_store %arg8[%c0_53, %c0_54], %60 {strides = array<i32>} : memref<16x768xf32, #tpu.memory_space<vmem>>, vector<16x768xf32>,
    return
  }
  func.func @transform_0(%arg0: i32) -> (i32, i32, i32) {
    %c0_i32 = arith.constant 0 : i32
    %c0_i32_0 = arith.constant 0 : i32
    %c0_i32_1 = arith.constant 0 : i32
    return %arg0, %c0_i32, %c0_i32_0 : i32, i32, i32
  }
  func.func @transform_1(%arg0: i32) -> (i32, i32) {
    %c0_i32 = arith.constant 0 : i32
    %c0_i32_0 = arith.constant 0 : i32
    %c0_i32_1 = arith.constant 0 : i32
    return %c0_i32, %c0_i32_0 : i32, i32
  }
  func.func @transform_2(%arg0: i32) -> (i32, i32) {
    %c0_i32 = arith.constant 0 : i32
    %c0_i32_0 = arith.constant 0 : i32
    %c0_i32_1 = arith.constant 0 : i32
    return %c0_i32, %c0_i32_0 : i32, i32
  }
  func.func @transform_3(%arg0: i32) -> (i32, i32, i32) {
    %c0_i32 = arith.constant 0 : i32
    %c0_i32_0 = arith.constant 0 : i32
    %c0_i32_1 = arith.constant 0 : i32
    %c0_i32_2 = arith.constant 0 : i32
    return %c0_i32, %c0_i32_0, %c0_i32_1 : i32, i32, i32
  }
  func.func @transform_4(%arg0: i32) -> (i32, i32) {
    %c0_i32 = arith.constant 0 : i32
    %c0_i32_0 = arith.constant 0 : i32
    %c0_i32_1 = arith.constant 0 : i32
    return %c0_i32, %c0_i32_0 : i32, i32
  }
  func.func @transform_5(%arg0: i32) -> (i32, i32) {
    %c0_i32 = arith.constant 0 : i32
    %c0_i32_0 = arith.constant 0 : i32
    %c0_i32_1 = arith.constant 0 : i32
    return %c0_i32, %c0_i32_0 : i32, i32
  }
  func.func @transform_6(%arg0: i32) -> (i32, i32) {
    %c0_i32 = arith.constant 0 : i32
    %c0_i32_0 = arith.constant 0 : i32
    %c0_i32_1 = arith.constant 0 : i32
    return %c0_i32, %c0_i32_0 : i32, i32
  }
  func.func @transform_7(%arg0: i32) -> (i32, i32) {
    %c0_i32 = arith.constant 0 : i32
    %c0_i32_0 = arith.constant 0 : i32
    return %arg0, %c0_i32 : i32, i32
  }
}

</mosaic_0001>

<llo_original>
// kernel: tpu_custom_call.1
$region0: #{tpu_custom_call.1}
  #allocation0 [shape = 'u32[]', space=smem, size = 0x4, offset = 0x4, fixed_abs, tag = 'smem constant byte address 0x4 - core index']
  #allocation1 [shape = 'u32[72,128]{1,0:T(1,128)}', space=vmem, size = 0x9000, scoped, tag = 'internal scratch']
  #allocation2 [shape = 'bf16[28,64]{1,0:T(8,128)(2,1)}', space=vmem, size = 0x2000, scoped, tag = 'scratch operand']
  %s0 = inlined_call_operand.hbm [shape: bf16[1,28,28], index: 0, kind: input, shape index: {}]
  %s1 = inlined_call_operand.hbm [shape: bf16[28,64], index: 1, kind: input, shape index: {}]
  %s2 = inlined_call_operand.vmem [shape: f32[1,64], index: 2, kind: input, shape index: {}]
  %s3 = inlined_call_operand.hbm [shape: bf16[7,64,64], index: 3, kind: input, shape index: {}]
  %s4 = inlined_call_operand.vmem [shape: f32[1,64], index: 4, kind: input, shape index: {}]
  %s5 = inlined_call_operand.hbm [shape: bf16[64,768], index: 5, kind: input, shape index: {}]
  %s6 = inlined_call_operand.hbm [shape: f32[1,768], index: 6, kind: input, shape index: {}]
  %s7 = inlined_call_operand.hbm [shape: f32[16,768], index: 7, kind: output, shape index: {}]
  %s8 = sld [smem:[#allocation0]]
  $region62: #{tpu_custom_call.1} parent=0
    _
  %s10 = ssub.s32 1, %s8
  %s11 = scalar_select 0, %s10, %s8
  $region1: #{tpu_custom_call.1} parent=0
    #allocation3 [shape = 'u8[8192]{0}', space=vmem, size = 0x2000, scoped, tag = 'input window, operand 0, single buffered']
    #allocation4 [shape = 's32[1]{0}', space=sflag, size = 0x4, scoped, tag = 'scoped memory for tpu_custom_call.1']
    #allocation5 [shape = 's32[1]{0}', space=sflag, size = 0x4, scoped, tag = 'scoped memory for tpu_custom_call.1']
    #allocation6 [shape = 'u8[8192]{0}', space=vmem, size = 0x2000, scoped, tag = 'input window, operand 1, single buffered']
    #allocation7 [shape = 's32[1]{0}', space=sflag, size = 0x4, scoped, tag = 'scoped memory for tpu_custom_call.1']
    #allocation8 [shape = 'u8[114688]{0}', space=vmem, size = 0x1c000, scoped, tag = 'input window, operand 3, single buffered']
    #allocation9 [shape = 'u8[98304]{0}', space=vmem, size = 0x18000, scoped, tag = 'input window, operand 5, single buffered']
    #allocation10 [shape = 's32[1]{0}', space=sflag, size = 0x4, scoped, tag = 'scoped memory for tpu_custom_call.1']
    #allocation11 [shape = 'u8[3072]{0}', space=vmem, size = 0xc00, scoped, tag = 'input window, operand 6, single buffered']
    #allocation12 [shape = 'u8[49152]{0}', space=vmem, size = 0xc000, scoped, tag = 'output window, operand 0, single buffered']
    %12 = vsyncpa [#allocation4], 0
    %13 = vsyncpa [#allocation7], 0
    %14 = vsyncpa [#allocation10], 0
    %15 = vsyncpa [#allocation5], 0
    // Predicated region
    $region2: #{tpu_custom_call.1} parent=1 // pred_check
      _
    $region3: #{tpu_custom_call.1} parent=1 // pred_check_branch
      %17 = sbr.rel (0) target = $region5
    $region4: #{tpu_custom_call.1} parent=1 // pred_region
      %19 = vsyncadd [#allocation4], 0
      %s20 = sshll.u32 %s0, 4
      %s21 = int_to_ptr.hbm [resolvable:$true] %s20
      %s22 = sshll.u32 [#allocation3], 4
      %s23 = int_to_ptr.vmem [resolvable:$true] %s22
      %28 = dma.hbm_to_vmem [thread:$0]  %s21, 256, %s23, [#allocation4], 64, 64, 4
    $region5: #{tpu_custom_call.1} parent=1 // pred_fallthru
      _
    // Predicated region
    $region6: #{tpu_custom_call.1} parent=1 // pred_check
      _
    $region7: #{tpu_custom_call.1} parent=1 // pred_check_branch
      %30 = sbr.rel (0) target = $region9
    $region8: #{tpu_custom_call.1} parent=1 // pred_region
      %32 = vsyncadd [#allocation7], 0
      %s33 = sshll.u32 %s1, 4
      %s34 = int_to_ptr.hbm [resolvable:$true] %s33
      %s35 = sshll.u32 [#allocation6], 4
      %s36 = int_to_ptr.vmem [resolvable:$true] %s35
      %41 = dma.hbm_to_vmem [thread:$0]  %s34, 256, %s36, [#allocation7], 64, 64, 4
    $region9: #{tpu_custom_call.1} parent=1 // pred_fallthru
      _
    // Predicated region
    $region10: #{tpu_custom_call.1} parent=1 // pred_check
      _
    $region11: #{tpu_custom_call.1} parent=1 // pred_check_branch
      %43 = sbr.rel (0) target = $region13
    $region12: #{tpu_custom_call.1} parent=1 // pred_region
      _
    $region13: #{tpu_custom_call.1} parent=1 // pred_fallthru
      _
    // Predicated region
    $region14: #{tpu_custom_call.1} parent=1 // pred_check
      _
    $region15: #{tpu_custom_call.1} parent=1 // pred_check_branch
      %45 = sbr.rel (0) target = $region17
    $region16: #{tpu_custom_call.1} parent=1 // pred_region
      %47 = vsyncadd [#allocation7], 0
      %s48 = sshll.u32 %s3, 4
      %s49 = int_to_ptr.hbm [resolvable:$true] %s48
      %s50 = sshll.u32 [#allocation8], 4
      %s51 = int_to_ptr.vmem [resolvable:$true] %s50
      %56 = dma.hbm_to_vmem [thread:$0]  %s49, 3584, %s51, [#allocation7], 64, 64, 4
    $region17: #{tpu_custom_call.1} parent=1 // pred_fallthru
      _
    // Predicated region
    $region18: #{tpu_custom_call.1} parent=1 // pred_check
      _
    $region19: #{tpu_custom_call.1} parent=1 // pred_check_branch
      %58 = sbr.rel (0) target = $region21
    $region20: #{tpu_custom_call.1} parent=1 // pred_region
      _
    $region21: #{tpu_custom_call.1} parent=1 // pred_fallthru
      _
    // Predicated region
    $region22: #{tpu_custom_call.1} parent=1 // pred_check
      _
    $region23: #{tpu_custom_call.1} parent=1 // pred_check_branch
      %60 = sbr.rel (0) target = $region25
    $region24: #{tpu_custom_call.1} parent=1 // pred_region
      %62 = vsyncadd [#allocation10], 0
      %s63 = sshll.u32 %s5, 4
      %s64 = int_to_ptr.hbm [resolvable:$true] %s63
      %s65 = sshll.u32 [#allocation9], 4
      %s66 = int_to_ptr.vmem [resolvable:$true] %s65
      %71 = dma.hbm_to_vmem [thread:$0]  %s64, 3072, %s66, [#allocation10], 384, 384, 24
    $region25: #{tpu_custom_call.1} parent=1 // pred_fallthru
      _
    // Predicated region
    $region26: #{tpu_custom_call.1} parent=1 // pred_check
      _
    $region27: #{tpu_custom_call.1} parent=1 // pred_check_branch
      %73 = sbr.rel (0) target = $region29
    $region28: #{tpu_custom_call.1} parent=1 // pred_region
      %75 = vsyncadd [#allocation10], 0
      %s77 = sshll.u32 %s6, 4
      %s78 = int_to_ptr.hbm [resolvable:$true] %s77
      %s79 = sshll.u32 [#allocation11], 4
      %s80 = int_to_ptr.vmem [resolvable:$true] %s79
      %82 = dma.hbm_to_vmem [thread:$0]  %s78, 96, %s80, [#allocation10]
    $region29: #{tpu_custom_call.1} parent=1 // pred_fallthru
      _
    // Predicated region
    $region30: #{tpu_custom_call.1} parent=1 // pred_check
      _
    $region31: #{tpu_custom_call.1} parent=1 // pred_check_branch
      %84 = sbr.rel (0) target = $region33
    $region32: #{tpu_custom_call.1} parent=1 // pred_region
      %86 = dma.done [#allocation4], 256
    $region33: #{tpu_custom_call.1} parent=1 // pred_fallthru
      _
    // Predicated region
    $region34: #{tpu_custom_call.1} parent=1 // pred_check
      _
    $region35: #{tpu_custom_call.1} parent=1 // pred_check_branch
      %88 = sbr.rel (0) target = $region37
    $region36: #{tpu_custom_call.1} parent=1 // pred_region
      %90 = dma.done [#allocation7], 256
    $region37: #{tpu_custom_call.1} parent=1 // pred_fallthru
      _
    // Predicated region
    $region38: #{tpu_custom_call.1} parent=1 // pred_check
      _
    $region39: #{tpu_custom_call.1} parent=1 // pred_check_branch
      %92 = sbr.rel (0) target = $region41
    $region40: #{tpu_custom_call.1} parent=1 // pred_region
      %94 = dma.done [#allocation7], 3584
    $region41: #{tpu_custom_call.1} parent=1 // pred_fallthru
      _
    // Predicated region
    $region42: #{tpu_custom_call.1} parent=1 // pred_check
      _
    $region43: #{tpu_custom_call.1} parent=1 // pred_check_branch
      %96 = sbr.rel (0) target = $region45
    $region44: #{tpu_custom_call.1} parent=1 // pred_region
      %98 = dma.done [#allocation10], 3072
    $region45: #{tpu_custom_call.1} parent=1 // pred_fallthru
      _
    // Predicated region
    $region46: #{tpu_custom_call.1} parent=1 // pred_check
      _
    $region47: #{tpu_custom_call.1} parent=1 // pred_check_branch
      %100 = sbr.rel (0) target = $region49
    $region48: #{tpu_custom_call.1} parent=1 // pred_region
      %102 = dma.done [#allocation10], 96
    $region49: #{tpu_custom_call.1} parent=1 // pred_fallthru
      _
    %v104 = vld [vmem:[#allocation3] sm:$0xf]
    %v105 = vld [vmem:[#allocation3 + $0x4] sm:$0xf]
    %v106 = vld [vmem:[#allocation3 + $0x8] sm:$0xf]
    %v107 = vld [vmem:[#allocation3 + $0xc] sm:$0x3]
    %v108 = vld [vmem:[#allocation6] sm:$0xf]
    %v109 = vld [vmem:[#allocation6 + $0x4] sm:$0xf]
    %v110 = vld [vmem:[#allocation6 + $0x8] sm:$0xf]
    %v111 = vld [vmem:[#allocation6 + $0xc] sm:$0x3]
    %v112 = vld [vmem:[%s2] sm:$0x1]
    %v114 = vperm.slane %v112, 0
    %v120 = vunpack.c.l.b16 %v104
    %v121 = vunpack.c.l.b16 %v105
    %v122 = vunpack.c.l.b16 %v106
    %v123 = vunpack.c.l.b16 %v107
    %v124 = vpack.c.b16 %v121, %v120
    %v125 = vpack.c.b16 %v123, %v122
    %v130 = vunpack.c.l.b16 %v108
    %v131 = vunpack.c.l.b16 %v109
    %v132 = vunpack.c.l.b16 %v110
    %v133 = vunpack.c.l.b16 %v111
    %v134 = vpack.c.b16 %v131, %v130
    %v135 = vpack.c.b16 %v133, %v132
    %vm137 = vcmask 228352
    %v139 = vsel %vm137, %v124, 0
    %v142 = vsel %vm137, %v125, 0
    %vm144 = vcmask 1045504
    %v146 = vsel %vm144, %v135, 0
    %148 = vmatpush.bf16.msra.mxu0 0
    %149 = vmatpush.bf16.msra.mxu0 0
    %150 = vmatpush.bf16.msra.mxu0 0
    %151 = vmatpush.bf16.msra.mxu0 0
    %152 = vmatpush.bf16.msra.mxu0 0
    %153 = vmatpush.bf16.msra.mxu0 0
    %154 = vmatpush.bf16.msra.mxu0 %v146
    %155 = vmatpush.bf16.msra.mxu0 %v134
    %156 = vmatmul.bf16.gmra.mxu0 %v139
    %v157 = vpop.f32.mrf.mxu0
    %v158 = vadd.f32 %v114, %v157
    %v159 = vpop.f32.mrf.mxu0
    %v160 = vadd.f32 %v114, %v159
    %161 = vmatmul.bf16.gmra.mxu0 %v142
    %v162 = vpop.f32.mrf.mxu0
    %v163 = vadd.f32 %v114, %v162
    %v164 = vpop.f32.mrf.mxu0
    %v165 = vadd.f32 %v114, %v164
    %166 = vdwg.mxu0
    %v167 = vpack.c.bf16 %v158, %v158
    %v168 = vpack.c.bf16 %v160, %v160
    %v169 = vpack.c.bf16 %v163, %v163
    %v170 = vpack.c.bf16 %v165, %v165
    %vm171 = vcmask 519168
    %172 = vst.msk [vmem:[#allocation2] sm:$0xf] %vm171, %v167
    %173 = vst.msk [vmem:[#allocation2 + $0x4] sm:$0xf] %vm171, %v168
    %174 = vst.msk [vmem:[#allocation2 + $0x8] sm:$0xf] %vm171, %v169
    %vm175 = vcmask 517120
    %176 = vst.msk [vmem:[#allocation2 + $0xc] sm:$0x3] %vm175, %v170
    %p177 = scmp.eq.s32.totalorder 0, 0
    // Predicated region
    $region50: #{tpu_custom_call.1} parent=1 // pred_check
      %p178 = pneg %p177
    $region51: #{tpu_custom_call.1} parent=1 // pred_check_branch
      %180 = sbr.rel (%p178) target = $region53
    $region52: #{tpu_custom_call.1} parent=1 // pred_region
      %vm181 = vcmask 518144
      %182 = vst.msk [vmem:[#allocation2] sm:$0x7] %vm181, 0
      %vm183 = vcmask 519171
      %184 = vst.msk [vmem:[#allocation2 + $0x8] sm:$0x8] %vm183, 0
      %185 = vst.msk [vmem:[#allocation2 + $0xc] sm:$0x3] %vm175, 0
    $region53: #{tpu_custom_call.1} parent=1 // pred_fallthru
      _
    %v186 = vld [vmem:[#allocation2] sm:$0xf]
    %v187 = vld [vmem:[#allocation2 + $0x4] sm:$0xf]
    %v188 = vld [vmem:[#allocation8] sm:$0xf]
    %v189 = vld [vmem:[#allocation8 + $0x4] sm:$0xf]
    %v190 = vld [vmem:[#allocation8 + $0x8] sm:$0xf]
    %v191 = vld [vmem:[#allocation8 + $0xc] sm:$0xf]
    %v192 = vld [vmem:[#allocation8 + $0x10] sm:$0xf]
    %v193 = vld [vmem:[#allocation8 + $0x14] sm:$0xf]
    %v194 = vld [vmem:[#allocation8 + $0x18] sm:$0xf]
    %v195 = vld [vmem:[#allocation8 + $0x1c] sm:$0xf]
    %v196 = vld [vmem:[#allocation2] sm:$0xe]
    %v197 = vld [vmem:[#allocation2 + $0x8] sm:$0x1]
    %s198 = scalar_lea.vmem [#allocation8], 32
    %v199 = vld [vmem:[%s198] sm:$0xf]
    %v200 = vld [vmem:[%s198 + $0x4] sm:$0xf]
    %v201 = vld [vmem:[%s198 + $0x8] sm:$0xf]
    %v202 = vld [vmem:[%s198 + $0xc] sm:$0xf]
    %v203 = vld [vmem:[%s198 + $0x10] sm:$0xf]
    %v204 = vld [vmem:[%s198 + $0x14] sm:$0xf]
    %v205 = vld [vmem:[%s198 + $0x18] sm:$0xf]
    %v206 = vld [vmem:[%s198 + $0x1c] sm:$0xf]
    %v210 = vunpack.c.l.b16 %v196
    %v211 = vunpack.c.l.b16 %v187
    %v212 = vunpack.c.l.b16 %v197
    %v213 = vpack.c.b16 %v211, %v210
    %v214 = vpack.c.b16 %v212, %v212
    %vm215 = vcmask 1046528
    %v216 = vrot.slane %v213, 1
    %v217 = vrot.slane %v214, 1
    %v218 = vsel %vm215, %v216, %v217
    %v227 = vunpack.c.l.b16 %v199
    %v228 = vunpack.c.l.b16 %v200
    %v229 = vunpack.c.l.b16 %v201
    %v230 = vunpack.c.l.b16 %v202
    %v231 = vunpack.c.l.b16 %v203
    %v232 = vunpack.c.l.b16 %v204
    %v233 = vunpack.c.l.b16 %v205
    %v234 = vunpack.c.l.b16 %v206
    %v235 = vpack.c.b16 %v228, %v227
    %v236 = vpack.c.b16 %v230, %v229
    %v237 = vpack.c.b16 %v232, %v231
    %v238 = vpack.c.b16 %v234, %v233
    %vm243 = vcmask 523264
    %v245 = vsel %vm243, %v218, 0
    %247 = vmatpush.bf16.msra.mxu0 0
    %248 = vmatpush.bf16.msra.mxu0 0
    %249 = vmatpush.bf16.msra.mxu0 0
    %250 = vmatpush.bf16.msra.mxu0 0
    %251 = vmatpush.bf16.msra.mxu0 %v238
    %252 = vmatpush.bf16.msra.mxu0 %v237
    %253 = vmatpush.bf16.msra.mxu0 %v236
    %254 = vmatpush.bf16.msra.mxu0 %v235
    %255 = vmatmul.bf16.gmra.mxu0 %v245
    %v256 = vpop.f32.mrf.mxu0
    %v257 = vadd.f32 0.0, %v256
    %v258 = vpop.f32.mrf.mxu0
    %v259 = vadd.f32 0.0, %v258
    %260 = vdwg.mxu0
    %v262 = vunpack.c.l.b16 %v186
    %v263 = vpack.c.b16 %v211, %v262
    %v272 = vunpack.c.l.b16 %v188
    %v273 = vunpack.c.l.b16 %v189
    %v274 = vunpack.c.l.b16 %v190
    %v275 = vunpack.c.l.b16 %v191
    %v276 = vunpack.c.l.b16 %v192
    %v277 = vunpack.c.l.b16 %v193
    %v278 = vunpack.c.l.b16 %v194
    %v279 = vunpack.c.l.b16 %v195
    %v280 = vpack.c.b16 %v273, %v272
    %v281 = vpack.c.b16 %v275, %v274
    %v282 = vpack.c.b16 %v277, %v276
    %v283 = vpack.c.b16 %v279, %v278
    %v289 = vsel %vm243, %v263, 0
    %291 = vmatpush.bf16.msra.mxu0 0
    %292 = vmatpush.bf16.msra.mxu0 0
    %293 = vmatpush.bf16.msra.mxu0 0
    %294 = vmatpush.bf16.msra.mxu0 0
    %295 = vmatpush.bf16.msra.mxu0 %v283
    %296 = vmatpush.bf16.msra.mxu0 %v282
    %297 = vmatpush.bf16.msra.mxu0 %v281
    %298 = vmatpush.bf16.msra.mxu0 %v280
    %299 = vmatmul.bf16.gmra.mxu0 %v289
    %v300 = vpop.f32.mrf.mxu0
    %v301 = vadd.f32 %v257, %v300
    %v302 = vpop.f32.mrf.mxu0
    %v303 = vadd.f32 %v259, %v302
    %304 = vdwg.mxu0
    %v305 = vld [vmem:[#allocation2] sm:$0xc]
    %v306 = vld [vmem:[#allocation2 + $0x8] sm:$0x3]
    %s307 = scalar_lea.vmem [#allocation8], 64
    %v308 = vld [vmem:[%s307] sm:$0xf]
    %v309 = vld [vmem:[%s307 + $0x4] sm:$0xf]
    %v310 = vld [vmem:[%s307 + $0x8] sm:$0xf]
    %v311 = vld [vmem:[%s307 + $0xc] sm:$0xf]
    %v312 = vld [vmem:[%s307 + $0x10] sm:$0xf]
    %v313 = vld [vmem:[%s307 + $0x14] sm:$0xf]
    %v314 = vld [vmem:[%s307 + $0x18] sm:$0xf]
    %v315 = vld [vmem:[%s307 + $0x1c] sm:$0xf]
    %v318 = vunpack.c.l.b16 %v305
    %v319 = vunpack.c.l.b16 %v306
    %v320 = vpack.c.b16 %v211, %v318
    %v321 = vpack.c.b16 %v319, %v319
    %vm322 = vcmask 1045504
    %v323 = vrot.slane %v320, 2
    %v324 = vrot.slane %v321, 2
    %v325 = vsel %vm322, %v323, %v324
    %v334 = vunpack.c.l.b16 %v308
    %v335 = vunpack.c.l.b16 %v309
    %v336 = vunpack.c.l.b16 %v310
    %v337 = vunpack.c.l.b16 %v311
    %v338 = vunpack.c.l.b16 %v312
    %v339 = vunpack.c.l.b16 %v313
    %v340 = vunpack.c.l.b16 %v314
    %v341 = vunpack.c.l.b16 %v315
    %v342 = vpack.c.b16 %v335, %v334
    %v343 = vpack.c.b16 %v337, %v336
    %v344 = vpack.c.b16 %v339, %v338
    %v345 = vpack.c.b16 %v341, %v340
    %v351 = vsel %vm243, %v325, 0
    %353 = vmatpush.bf16.msra.mxu0 0
    %354 = vmatpush.bf16.msra.mxu0 0
    %355 = vmatpush.bf16.msra.mxu0 0
    %356 = vmatpush.bf16.msra.mxu0 0
    %357 = vmatpush.bf16.msra.mxu0 %v345
    %358 = vmatpush.bf16.msra.mxu0 %v344
    %359 = vmatpush.bf16.msra.mxu0 %v343
    %360 = vmatpush.bf16.msra.mxu0 %v342
    %361 = vmatmul.bf16.gmra.mxu0 %v351
    %v362 = vpop.f32.mrf.mxu0
    %v363 = vadd.f32 0.0, %v362
    %v364 = vpop.f32.mrf.mxu0
    %v365 = vadd.f32 0.0, %v364
    %366 = vdwg.mxu0
    %v367 = vadd.f32 %v301, %v363
    %v368 = vadd.f32 %v303, %v365
    %v369 = vld [vmem:[#allocation2] sm:$0x8]
    %v370 = vld [vmem:[#allocation2 + $0x8] sm:$0x7]
    %s371 = scalar_lea.vmem [#allocation8], 96
    %v372 = vld [vmem:[%s371] sm:$0xf]
    %v373 = vld [vmem:[%s371 + $0x4] sm:$0xf]
    %v374 = vld [vmem:[%s371 + $0x8] sm:$0xf]
    %v375 = vld [vmem:[%s371 + $0xc] sm:$0xf]
    %v376 = vld [vmem:[%s371 + $0x10] sm:$0xf]
    %v377 = vld [vmem:[%s371 + $0x14] sm:$0xf]
    %v378 = vld [vmem:[%s371 + $0x18] sm:$0xf]
    %v379 = vld [vmem:[%s371 + $0x1c] sm:$0xf]
    %v382 = vunpack.c.l.b16 %v369
    %v383 = vunpack.c.l.b16 %v370
    %v384 = vpack.c.b16 %v211, %v382
    %v385 = vpack.c.b16 %v383, %v383
    %vm386 = vcmask 1044480
    %v387 = vrot.slane %v384, 3
    %v388 = vrot.slane %v385, 3
    %v389 = vsel %vm386, %v387, %v388
    %v398 = vunpack.c.l.b16 %v372
    %v399 = vunpack.c.l.b16 %v373
    %v400 = vunpack.c.l.b16 %v374
    %v401 = vunpack.c.l.b16 %v375
    %v402 = vunpack.c.l.b16 %v376
    %v403 = vunpack.c.l.b16 %v377
    %v404 = vunpack.c.l.b16 %v378
    %v405 = vunpack.c.l.b16 %v379
    %v406 = vpack.c.b16 %v399, %v398
    %v407 = vpack.c.b16 %v401, %v400
    %v408 = vpack.c.b16 %v403, %v402
    %v409 = vpack.c.b16 %v405, %v404
    %v415 = vsel %vm243, %v389, 0
    %417 = vmatpush.bf16.msra.mxu0 0
    %418 = vmatpush.bf16.msra.mxu0 0
    %419 = vmatpush.bf16.msra.mxu0 0
    %420 = vmatpush.bf16.msra.mxu0 0
    %421 = vmatpush.bf16.msra.mxu0 %v409
    %422 = vmatpush.bf16.msra.mxu0 %v408
    %423 = vmatpush.bf16.msra.mxu0 %v407
    %424 = vmatpush.bf16.msra.mxu0 %v406
    %425 = vmatmul.bf16.gmra.mxu0 %v415
    %v426 = vpop.f32.mrf.mxu0
    %v427 = vadd.f32 0.0, %v426
    %v428 = vpop.f32.mrf.mxu0
    %v429 = vadd.f32 0.0, %v428
    %430 = vdwg.mxu0
    %v431 = vadd.f32 %v367, %v427
    %v432 = vadd.f32 %v368, %v429
    %v433 = vld [vmem:[#allocation2 + $0x8] sm:$0xf]
    %s434 = scalar_lea.vmem [#allocation8], 128
    %v435 = vld [vmem:[%s434] sm:$0xf]
    %v436 = vld [vmem:[%s434 + $0x4] sm:$0xf]
    %v437 = vld [vmem:[%s434 + $0x8] sm:$0xf]
    %v438 = vld [vmem:[%s434 + $0xc] sm:$0xf]
    %v439 = vld [vmem:[%s434 + $0x10] sm:$0xf]
    %v440 = vld [vmem:[%s434 + $0x14] sm:$0xf]
    %v441 = vld [vmem:[%s434 + $0x18] sm:$0xf]
    %v442 = vld [vmem:[%s434 + $0x1c] sm:$0xf]
    %v444 = vunpack.c.l.b16 %v433
    %v445 = vpack.c.b16 %v444, %v211
    %v454 = vunpack.c.l.b16 %v435
    %v455 = vunpack.c.l.b16 %v436
    %v456 = vunpack.c.l.b16 %v437
    %v457 = vunpack.c.l.b16 %v438
    %v458 = vunpack.c.l.b16 %v439
    %v459 = vunpack.c.l.b16 %v440
    %v460 = vunpack.c.l.b16 %v441
    %v461 = vunpack.c.l.b16 %v442
    %v462 = vpack.c.b16 %v455, %v454
    %v463 = vpack.c.b16 %v457, %v456
    %v464 = vpack.c.b16 %v459, %v458
    %v465 = vpack.c.b16 %v461, %v460
    %v471 = vsel %vm243, %v445, 0
    %473 = vmatpush.bf16.msra.mxu0 0
    %474 = vmatpush.bf16.msra.mxu0 0
    %475 = vmatpush.bf16.msra.mxu0 0
    %476 = vmatpush.bf16.msra.mxu0 0
    %477 = vmatpush.bf16.msra.mxu0 %v465
    %478 = vmatpush.bf16.msra.mxu0 %v464
    %479 = vmatpush.bf16.msra.mxu0 %v463
    %480 = vmatpush.bf16.msra.mxu0 %v462
    %481 = vmatmul.bf16.gmra.mxu0 %v471
    %v482 = vpop.f32.mrf.mxu0
    %v483 = vadd.f32 0.0, %v482
    %v484 = vpop.f32.mrf.mxu0
    %v485 = vadd.f32 0.0, %v484
    %486 = vdwg.mxu0
    %v487 = vadd.f32 %v431, %v483
    %v488 = vadd.f32 %v432, %v485
    %v489 = vld [vmem:[#allocation2 + $0x4] sm:$0xe]
    %v490 = vld [vmem:[#allocation2 + $0x8] sm:$0xf]
    %v491 = vld [vmem:[#allocation2 + $0xc] sm:$0x1]
    %s492 = scalar_lea.vmem [#allocation8], 160
    %v493 = vld [vmem:[%s492] sm:$0xf]
    %v494 = vld [vmem:[%s492 + $0x4] sm:$0xf]
    %v495 = vld [vmem:[%s492 + $0x8] sm:$0xf]
    %v496 = vld [vmem:[%s492 + $0xc] sm:$0xf]
    %v497 = vld [vmem:[%s492 + $0x10] sm:$0xf]
    %v498 = vld [vmem:[%s492 + $0x14] sm:$0xf]
    %v499 = vld [vmem:[%s492 + $0x18] sm:$0xf]
    %v500 = vld [vmem:[%s492 + $0x1c] sm:$0xf]
    %v504 = vunpack.c.l.b16 %v489
    %v505 = vunpack.c.l.b16 %v490
    %v506 = vunpack.c.l.b16 %v491
    %v507 = vpack.c.b16 %v505, %v504
    %v508 = vpack.c.b16 %v506, %v506
    %v509 = vrot.slane %v507, 1
    %v510 = vrot.slane %v508, 1
    %v511 = vsel %vm215, %v509, %v510
    %v520 = vunpack.c.l.b16 %v493
    %v521 = vunpack.c.l.b16 %v494
    %v522 = vunpack.c.l.b16 %v495
    %v523 = vunpack.c.l.b16 %v496
    %v524 = vunpack.c.l.b16 %v497
    %v525 = vunpack.c.l.b16 %v498
    %v526 = vunpack.c.l.b16 %v499
    %v527 = vunpack.c.l.b16 %v500
    %v528 = vpack.c.b16 %v521, %v520
    %v529 = vpack.c.b16 %v523, %v522
    %v530 = vpack.c.b16 %v525, %v524
    %v531 = vpack.c.b16 %v527, %v526
    %v537 = vsel %vm243, %v511, 0
    %539 = vmatpush.bf16.msra.mxu0 0
    %540 = vmatpush.bf16.msra.mxu0 0
    %541 = vmatpush.bf16.msra.mxu0 0
    %542 = vmatpush.bf16.msra.mxu0 0
    %543 = vmatpush.bf16.msra.mxu0 %v531
    %544 = vmatpush.bf16.msra.mxu0 %v530
    %545 = vmatpush.bf16.msra.mxu0 %v529
    %546 = vmatpush.bf16.msra.mxu0 %v528
    %547 = vmatmul.bf16.gmra.mxu0 %v537
    %v548 = vpop.f32.mrf.mxu0
    %v549 = vadd.f32 0.0, %v548
    %v550 = vpop.f32.mrf.mxu0
    %v551 = vadd.f32 0.0, %v550
    %552 = vdwg.mxu0
    %v553 = vadd.f32 %v487, %v549
    %v554 = vadd.f32 %v488, %v551
    %v555 = vld [vmem:[#allocation2 + $0x4] sm:$0xc]
    %v556 = vld [vmem:[#allocation2 + $0xc] sm:$0x3]
    %s557 = scalar_lea.vmem [#allocation8], 192
    %v558 = vld [vmem:[%s557] sm:$0xf]
    %v559 = vld [vmem:[%s557 + $0x4] sm:$0xf]
    %v560 = vld [vmem:[%s557 + $0x8] sm:$0xf]
    %v561 = vld [vmem:[%s557 + $0xc] sm:$0xf]
    %v562 = vld [vmem:[%s557 + $0x10] sm:$0xf]
    %v563 = vld [vmem:[%s557 + $0x14] sm:$0xf]
    %v564 = vld [vmem:[%s557 + $0x18] sm:$0xf]
    %v565 = vld [vmem:[%s557 + $0x1c] sm:$0xf]
    %v568 = vunpack.c.l.b16 %v555
    %v569 = vunpack.c.l.b16 %v556
    %v570 = vpack.c.b16 %v505, %v568
    %v571 = vpack.c.b16 %v569, %v569
    %v572 = vrot.slane %v570, 2
    %v573 = vrot.slane %v571, 2
    %v574 = vsel %vm322, %v572, %v573
    %v583 = vunpack.c.l.b16 %v558
    %v584 = vunpack.c.l.b16 %v559
    %v585 = vunpack.c.l.b16 %v560
    %v586 = vunpack.c.l.b16 %v561
    %v587 = vunpack.c.l.b16 %v562
    %v588 = vunpack.c.l.b16 %v563
    %v589 = vunpack.c.l.b16 %v564
    %v590 = vunpack.c.l.b16 %v565
    %v591 = vpack.c.b16 %v584, %v583
    %v592 = vpack.c.b16 %v586, %v585
    %v593 = vpack.c.b16 %v588, %v587
    %v594 = vpack.c.b16 %v590, %v589
    %v600 = vsel %vm243, %v574, 0
    %602 = vmatpush.bf16.msra.mxu0 0
    %603 = vmatpush.bf16.msra.mxu0 0
    %604 = vmatpush.bf16.msra.mxu0 0
    %605 = vmatpush.bf16.msra.mxu0 0
    %606 = vmatpush.bf16.msra.mxu0 %v594
    %607 = vmatpush.bf16.msra.mxu0 %v593
    %608 = vmatpush.bf16.msra.mxu0 %v592
    %609 = vmatpush.bf16.msra.mxu0 %v591
    %610 = vmatmul.bf16.gmra.mxu0 %v600
    %v611 = vpop.f32.mrf.mxu0
    %v612 = vadd.f32 0.0, %v611
    %v613 = vpop.f32.mrf.mxu0
    %v614 = vadd.f32 0.0, %v613
    %615 = vdwg.mxu0
    %v616 = vadd.f32 %v553, %v612
    %v617 = vadd.f32 %v554, %v614
    %v618 = vld [vmem:[%s4] sm:$0x1]
    %v620 = vperm.slane %v618, 0
    %v622 = vadd.f32 %v616, %v620
    %v623 = vadd.f32 %v617, %v620
    %v624 = vpack.c.bf16 %v623, %v622
    %v625 = vld [vmem:[#allocation9] sm:$0xff]
    %v626 = vld [vmem:[#allocation9 + $0x8] sm:$0xff]
    %v627 = vld [vmem:[#allocation9 + $0x10] sm:$0xff]
    %v628 = vld [vmem:[#allocation9 + $0x18] sm:$0xff]
    %v629 = vld [vmem:[#allocation9 + $0x20] sm:$0xff]
    %v630 = vld [vmem:[#allocation9 + $0x28] sm:$0xff]
    %v631 = vld [vmem:[#allocation9 + $0x30] sm:$0xff]
    %v632 = vld [vmem:[#allocation9 + $0x38] sm:$0xff]
    %v633 = vld [vmem:[#allocation9 + $0x40] sm:$0xff]
    %v634 = vld [vmem:[#allocation9 + $0x48] sm:$0xff]
    %v635 = vld [vmem:[#allocation9 + $0x50] sm:$0xff]
    %v636 = vld [vmem:[#allocation9 + $0x58] sm:$0xff]
    %v637 = vld [vmem:[#allocation9 + $0x60] sm:$0xff]
    %v638 = vld [vmem:[#allocation9 + $0x68] sm:$0xff]
    %v639 = vld [vmem:[#allocation9 + $0x70] sm:$0xff]
    %v640 = vld [vmem:[#allocation9 + $0x78] sm:$0xff]
    %v641 = vld [vmem:[#allocation9 + $0x80] sm:$0xff]
    %v642 = vld [vmem:[#allocation9 + $0x88] sm:$0xff]
    %v643 = vld [vmem:[#allocation9 + $0x90] sm:$0xff]
    %v644 = vld [vmem:[#allocation9 + $0x98] sm:$0xff]
    %v645 = vld [vmem:[#allocation9 + $0xa0] sm:$0xff]
    %v646 = vld [vmem:[#allocation9 + $0xa8] sm:$0xff]
    %v647 = vld [vmem:[#allocation9 + $0xb0] sm:$0xff]
    %v648 = vld [vmem:[#allocation9 + $0xb8] sm:$0xff]
    %v649 = vld [vmem:[#allocation11] sm:$0x3f]
    %v651 = vperm.slane %v649, 0
    %v652 = vperm.slane %v649, 1
    %v653 = vperm.slane %v649, 2
    %v654 = vperm.slane %v649, 3
    %v655 = vperm.slane %v649, 4
    %v656 = vperm.slane %v649, 5
    %v687 = vunpack.c.l.b16 %v625
    %v688 = vunpack.c.h.b16 %v625
    %v689 = vunpack.c.l.b16 %v626
    %v690 = vunpack.c.h.b16 %v626
    %v691 = vunpack.c.l.b16 %v627
    %v692 = vunpack.c.h.b16 %v627
    %v693 = vunpack.c.l.b16 %v628
    %v694 = vunpack.c.h.b16 %v628
    %v695 = vunpack.c.l.b16 %v629
    %v696 = vunpack.c.h.b16 %v629
    %v697 = vunpack.c.l.b16 %v630
    %v698 = vunpack.c.h.b16 %v630
    %v699 = vunpack.c.l.b16 %v631
    %v700 = vunpack.c.h.b16 %v631
    %v701 = vunpack.c.l.b16 %v632
    %v702 = vunpack.c.h.b16 %v632
    %v703 = vunpack.c.l.b16 %v633
    %v704 = vunpack.c.h.b16 %v633
    %v705 = vunpack.c.l.b16 %v634
    %v706 = vunpack.c.h.b16 %v634
    %v707 = vunpack.c.l.b16 %v635
    %v708 = vunpack.c.h.b16 %v635
    %v709 = vunpack.c.l.b16 %v636
    %v710 = vunpack.c.h.b16 %v636
    %v711 = vunpack.c.l.b16 %v637
    %v712 = vunpack.c.h.b16 %v637
    %v713 = vunpack.c.l.b16 %v638
    %v714 = vunpack.c.h.b16 %v638
    %v715 = vunpack.c.l.b16 %v639
    %v716 = vunpack.c.h.b16 %v639
    %v717 = vunpack.c.l.b16 %v640
    %v718 = vunpack.c.h.b16 %v640
    %v719 = vunpack.c.l.b16 %v641
    %v720 = vunpack.c.h.b16 %v641
    %v721 = vunpack.c.l.b16 %v642
    %v722 = vunpack.c.h.b16 %v642
    %v723 = vunpack.c.l.b16 %v643
    %v724 = vunpack.c.h.b16 %v643
    %v725 = vunpack.c.l.b16 %v644
    %v726 = vunpack.c.h.b16 %v644
    %v727 = vunpack.c.l.b16 %v645
    %v728 = vunpack.c.h.b16 %v645
    %v729 = vunpack.c.l.b16 %v646
    %v730 = vunpack.c.h.b16 %v646
    %v731 = vunpack.c.l.b16 %v647
    %v732 = vunpack.c.h.b16 %v647
    %v733 = vunpack.c.l.b16 %v648
    %v734 = vunpack.c.h.b16 %v648
    %v735 = vpack.c.b16 %v693, %v687
    %v736 = vpack.c.b16 %v694, %v688
    %v737 = vpack.c.b16 %v695, %v689
    %v738 = vpack.c.b16 %v696, %v690
    %v739 = vpack.c.b16 %v697, %v691
    %v740 = vpack.c.b16 %v698, %v692
    %v741 = vpack.c.b16 %v705, %v699
    %v742 = vpack.c.b16 %v706, %v700
    %v743 = vpack.c.b16 %v707, %v701
    %v744 = vpack.c.b16 %v708, %v702
    %v745 = vpack.c.b16 %v709, %v703
    %v746 = vpack.c.b16 %v710, %v704
    %v747 = vpack.c.b16 %v717, %v711
    %v748 = vpack.c.b16 %v718, %v712
    %v749 = vpack.c.b16 %v719, %v713
    %v750 = vpack.c.b16 %v720, %v714
    %v751 = vpack.c.b16 %v721, %v715
    %v752 = vpack.c.b16 %v722, %v716
    %v753 = vpack.c.b16 %v729, %v723
    %v754 = vpack.c.b16 %v730, %v724
    %v755 = vpack.c.b16 %v731, %v725
    %v756 = vpack.c.b16 %v732, %v726
    %v757 = vpack.c.b16 %v733, %v727
    %v758 = vpack.c.b16 %v734, %v728
    %v784 = vsel %vm243, %v624, 0
    %786 = vmatpush.bf16.msra.mxu0 0
    %787 = vmatpush.bf16.msra.mxu0 0
    %788 = vmatpush.bf16.msra.mxu0 0
    %789 = vmatpush.bf16.msra.mxu0 0
    %790 = vmatpush.bf16.msra.mxu0 %v753
    %791 = vmatpush.bf16.msra.mxu0 %v747
    %792 = vmatpush.bf16.msra.mxu0 %v741
    %793 = vmatpush.bf16.msra.mxu0 %v735
    %794 = vmatmul.bf16.gmra.mxu0 %v784
    %v795 = vpop.f32.mrf.mxu0
    %v796 = vadd.f32 %v651, %v795
    %v797 = vpop.f32.mrf.mxu0
    %v798 = vadd.f32 %v651, %v797
    %799 = vdwg.mxu0
    %800 = vmatpush.bf16.msra.mxu0 0
    %801 = vmatpush.bf16.msra.mxu0 0
    %802 = vmatpush.bf16.msra.mxu0 0
    %803 = vmatpush.bf16.msra.mxu0 0
    %804 = vmatpush.bf16.msra.mxu0 %v754
    %805 = vmatpush.bf16.msra.mxu0 %v748
    %806 = vmatpush.bf16.msra.mxu0 %v742
    %807 = vmatpush.bf16.msra.mxu0 %v736
    %808 = vmatmul.bf16.gmra.mxu0 %v784
    %v809 = vpop.f32.mrf.mxu0
    %v810 = vadd.f32 %v652, %v809
    %v811 = vpop.f32.mrf.mxu0
    %v812 = vadd.f32 %v652, %v811
    %813 = vdwg.mxu0
    %814 = vmatpush.bf16.msra.mxu0 0
    %815 = vmatpush.bf16.msra.mxu0 0
    %816 = vmatpush.bf16.msra.mxu0 0
    %817 = vmatpush.bf16.msra.mxu0 0
    %818 = vmatpush.bf16.msra.mxu0 %v755
    %819 = vmatpush.bf16.msra.mxu0 %v749
    %820 = vmatpush.bf16.msra.mxu0 %v743
    %821 = vmatpush.bf16.msra.mxu0 %v737
    %822 = vmatmul.bf16.gmra.mxu0 %v784
    %v823 = vpop.f32.mrf.mxu0
    %v824 = vadd.f32 %v653, %v823
    %v825 = vpop.f32.mrf.mxu0
    %v826 = vadd.f32 %v653, %v825
    %827 = vdwg.mxu0
    %828 = vmatpush.bf16.msra.mxu0 0
    %829 = vmatpush.bf16.msra.mxu0 0
    %830 = vmatpush.bf16.msra.mxu0 0
    %831 = vmatpush.bf16.msra.mxu0 0
    %832 = vmatpush.bf16.msra.mxu0 %v756
    %833 = vmatpush.bf16.msra.mxu0 %v750
    %834 = vmatpush.bf16.msra.mxu0 %v744
    %835 = vmatpush.bf16.msra.mxu0 %v738
    %836 = vmatmul.bf16.gmra.mxu0 %v784
    %v837 = vpop.f32.mrf.mxu0
    %v838 = vadd.f32 %v654, %v837
    %v839 = vpop.f32.mrf.mxu0
    %v840 = vadd.f32 %v654, %v839
    %841 = vdwg.mxu0
    %842 = vmatpush.bf16.msra.mxu0 0
    %843 = vmatpush.bf16.msra.mxu0 0
    %844 = vmatpush.bf16.msra.mxu0 0
    %845 = vmatpush.bf16.msra.mxu0 0
    %846 = vmatpush.bf16.msra.mxu0 %v757
    %847 = vmatpush.bf16.msra.mxu0 %v751
    %848 = vmatpush.bf16.msra.mxu0 %v745
    %849 = vmatpush.bf16.msra.mxu0 %v739
    %850 = vmatmul.bf16.gmra.mxu0 %v784
    %v851 = vpop.f32.mrf.mxu0
    %v852 = vadd.f32 %v655, %v851
    %v853 = vpop.f32.mrf.mxu0
    %v854 = vadd.f32 %v655, %v853
    %855 = vdwg.mxu0
    %856 = vmatpush.bf16.msra.mxu0 0
    %857 = vmatpush.bf16.msra.mxu0 0
    %858 = vmatpush.bf16.msra.mxu0 0
    %859 = vmatpush.bf16.msra.mxu0 0
    %860 = vmatpush.bf16.msra.mxu0 %v758
    %861 = vmatpush.bf16.msra.mxu0 %v752
    %862 = vmatpush.bf16.msra.mxu0 %v746
    %863 = vmatpush.bf16.msra.mxu0 %v740
    %864 = vmatmul.bf16.gmra.mxu0 %v784
    %v865 = vpop.f32.mrf.mxu0
    %v866 = vadd.f32 %v656, %v865
    %v867 = vpop.f32.mrf.mxu0
    %v868 = vadd.f32 %v656, %v867
    %869 = vdwg.mxu0
    %870 = vst [vmem:[#allocation12] sm:$0xff] %v796
    %871 = vst [vmem:[#allocation12 + $0x8] sm:$0xff] %v810
    %872 = vst [vmem:[#allocation12 + $0x10] sm:$0xff] %v824
    %873 = vst [vmem:[#allocation12 + $0x18] sm:$0xff] %v838
    %874 = vst [vmem:[#allocation12 + $0x20] sm:$0xff] %v852
    %875 = vst [vmem:[#allocation12 + $0x28] sm:$0xff] %v866
    %876 = vst [vmem:[#allocation12 + $0x30] sm:$0xff] %v798
    %877 = vst [vmem:[#allocation12 + $0x38] sm:$0xff] %v812
    %878 = vst [vmem:[#allocation12 + $0x40] sm:$0xff] %v826
    %879 = vst [vmem:[#allocation12 + $0x48] sm:$0xff] %v840
    %880 = vst [vmem:[#allocation12 + $0x50] sm:$0xff] %v854
    %881 = vst [vmem:[#allocation12 + $0x58] sm:$0xff] %v868
    // Predicated region
    $region54: #{tpu_custom_call.1} parent=1 // pred_check
      _
    $region55: #{tpu_custom_call.1} parent=1 // pred_check_branch
      %883 = sbr.rel (0) target = $region57
    $region56: #{tpu_custom_call.1} parent=1 // pred_region
      %885 = vsyncadd [#allocation5], 0
      %s886 = sshll.u32 [#allocation12], 4
      %s887 = int_to_ptr.vmem [resolvable:$true] %s886
      %s888 = sshll.u32 %s7, 4
      %s889 = int_to_ptr.hbm [resolvable:$true] %s888
      %894 = dma.vmem_to_hbm [thread:$0]  %s887, 1536, %s889, [#allocation5], 768, 768, 48
    $region57: #{tpu_custom_call.1} parent=1 // pred_fallthru
      _
    // Predicated region
    $region58: #{tpu_custom_call.1} parent=1 // pred_check
      _
    $region59: #{tpu_custom_call.1} parent=1 // pred_check_branch
      %896 = sbr.rel (0) target = $region61
    $region60: #{tpu_custom_call.1} parent=1 // pred_region
      %898 = dma.done [#allocation5], 1536
    $region61: #{tpu_custom_call.1} parent=1 // pred_fallthru
      _
    %899 = vsyncpa [#allocation4], 1
    %900 = vsyncpa [#allocation7], 1
    %901 = vsyncpa [#allocation10], 1
    %902 = vsyncpa [#allocation5], 1

</llo_original>
